<compile_context>
chip_gen: v6e
topology: v6e:2x2x1
jax: 0.10.0
libtpu: 0.0.40
codegen_flags: <defaults>
</compile_context>

<pallas_src>
import functools

import jax
import jax.numpy as jnp
from jax.experimental import pallas as pl
from jax.experimental.pallas import tpu as pltpu


def _gwd_kernel(pt_ref, loss_ref, *, eps):
    # pt_ref: (10, TR, 128); rows 0-4 = pred (xc,yc,w,h,theta), 5-9 = target
    v = pt_ref[...]                       # single load of the whole tile
    x1, y1, w1, h1, th1 = v[0], v[1], v[2], v[3], v[4]
    x2, y2, w2, h2, th2 = v[5], v[6], v[7], v[8], v[9]

    # --- 2x2 covariance per box (double-angle form of the reference formula:
    #     s_a = w/2*cos^2 + h/2*sin^2 = (w+h)/4 + (w-h)/4*cos(2t), etc.) ---
    c2t1 = jnp.cos(2.0 * th1)
    s2t1 = jnp.sin(2.0 * th1)
    c2t2 = jnp.cos(2.0 * th2)
    s2t2 = jnp.sin(2.0 * th2)
    sum1 = (w1 + h1) * 0.25
    dif1 = (w1 - h1) * 0.25
    sum2 = (w2 + h2) * 0.25
    dif2 = (w2 - h2) * 0.25

    s1a = sum1 + dif1 * c2t1
    s1b = dif1 * s2t1
    s1d = sum1 - dif1 * c2t1

    s2a = sum2 + dif2 * c2t2
    s2b = dif2 * s2t2
    s2d = sum2 - dif2 * c2t2

    # item1 = center distance^2
    dx = x1 - x2
    dy = y1 - y2
    item1 = dx * dx + dy * dy

    # trace(S1^2), trace(S2^2) from symmetric components
    tr_s1sq = s1a * s1a + 2.0 * s1b * s1b + s1d * s1d
    tr_s2sq = s2a * s2a + 2.0 * s2b * s2b + s2d * s2d

    # tr(A) = tr(S1 S2^2 S1) = tr((S2 S1)^T (S2 S1)) = ||S2 @ S1||_F^2
    m11 = s2a * s1a + s2b * s1b
    m12 = s2a * s1b + s2b * s1d
    m21 = s2b * s1a + s2d * s1b
    m22 = s2b * s1b + s2d * s1d
    tr_a = m11 * m11 + m12 * m12 + m21 * m21 + m22 * m22

    # sqrt(det(A)) = det(S1) * det(S2)  (both SPD for w,h > 0)
    det1 = s1a * s1d - s1b * s1b
    det2 = s2a * s2d - s2b * s2b

    # Closed-form trace of the 2x2 SPD square root:
    #   tr(sqrt(A)) = sqrt(lam1) + sqrt(lam2) = sqrt(tr(A) + 2*sqrt(det(A)))
    tr_sqrt_a = jnp.sqrt(jnp.maximum(tr_a + 2.0 * det1 * det2, 0.0))

    item2 = tr_s1sq + tr_s2sq - 2.0 * tr_sqrt_a

    wd = jnp.maximum(item1 + item2, 0.0)
    wd = jnp.sqrt(wd + eps)               # sqrt(>=0) is already >= 0

    # w_sim = 1 / (wd + 2): EUP approx reciprocal + one Newton refinement
    denom = wd + 2.0
    r = pl.reciprocal(denom, approx=True)
    r = r * (2.0 - denom * r)
    loss_ref[...] = 1.0 - r


def gwd_loss_per_box(pred, target, eps=1e-6, tr_max=64):
    """Per-box GWD loss via Pallas. pred/target: (n, 5) float32 -> (n,) float32."""
    n = pred.shape[0]

    # Adaptive row-block size: multiple of 8 sublanes, capped at tr_max so large
    # n amortizes the ~600-cycle per-grid-step overhead without over-padding
    # small n.  (On v7x, grids of length >= 2 shard across both TensorCores.)
    rows_needed = max(1, -(-n // 128))
    tr = min(tr_max, ((rows_needed + 7) // 8) * 8)
    n_blocks = -(-rows_needed // tr)
    rows_pad = n_blocks * tr
    n_pad = rows_pad * 128

    # Single packed input: (2, n, 5) -> zero-pad -> (10, R, 128).
    # Zero padding is benign with the closed form (no division by normA).
    pt = jnp.stack([pred.astype(jnp.float32), target.astype(jnp.float32)], axis=0)
    pt = jnp.pad(pt, ((0, 0), (0, n_pad - n), (0, 0)))
    PT = jnp.transpose(pt, (0, 2, 1)).reshape(10, rows_pad, 128)

    kernel = functools.partial(_gwd_kernel, eps=eps)

    # Advisory cost hint (VALU-light elementwise kernel; no MXU use).
    cost = pl.CostEstimate(flops=70 * n_pad,
                           transcendentals=7 * n_pad,
                           bytes_accessed=(10 + 1) * 4 * n_pad)

    out = pl.pallas_call(
        kernel,
        out_shape=jax.ShapeDtypeStruct((rows_pad, 128), jnp.float32),
        grid=(n_blocks,),
        in_specs=[pl.BlockSpec((10, tr, 128), lambda i: (0, i, 0))],
        out_specs=pl.BlockSpec((tr, 128), lambda i: (i, 0)),
        compiler_params=pltpu.CompilerParams(
            dimension_semantics=("parallel",)),
        cost_estimate=cost,
    )(PT)
    return out.reshape(-1)[:n]


class GWDLoss:
    """JAX/Pallas re-implementation of mmdet GWDLoss.forward."""

    def __init__(self, eps=1e-6, reduction='mean', loss_weight=1.0):
        self.eps = eps
        self.reduction = reduction
        self.loss_weight = loss_weight

    def __call__(self, pred, target, weight=None, avg_factor=None,
                 reduction_override=None):
        assert reduction_override in (None, 'none', 'mean', 'sum')
        reduction = reduction_override if reduction_override else self.reduction

        loss_all = gwd_loss_per_box(pred, target, eps=self.eps)  # (n,)

        if weight is None:
            if reduction == 'mean':
                red = jnp.mean(loss_all)
            elif reduction == 'sum':
                red = jnp.sum(loss_all)
            else:
                red = loss_all
            return self.loss_weight * red

        weight = jnp.asarray(weight, jnp.float32)
        # Fallback path (only when reduction != 'none'): no positive weights
        # -> (pred * weight).sum()
        any_pos = jnp.any(weight > 0)
        fallback = jnp.sum(pred * weight)

        w = weight
        if w.ndim > 1:
            w = w.mean(-1)
        mask = w > 0

        # Masked-row selection (torch boolean indexing) reproduced via where/count,
        # since the per-box loss is independent across rows.
        weighted = jnp.where(mask, loss_all * w, 0.0)
        cnt = jnp.sum(mask.astype(jnp.float32))
        if avg_factor is None:
            if reduction == 'mean':
                red = jnp.sum(weighted) / jnp.maximum(cnt, 1.0)
            elif reduction == 'sum':
                red = jnp.sum(weighted)
            else:
                # TODO(synk): reduction='none' with boolean masking yields a dynamic
                # shape; returning full-length masked-weighted losses instead.
                red = weighted
        else:
            red = jnp.sum(weighted) / avg_factor

        if reduction != 'none':
            return jnp.where(any_pos, self.loss_weight * red, fallback)
        return self.loss_weight * red


if __name__ == "__main__":
    key = jax.random.PRNGKey(0)
    k1, k2, k3, k4, k5 = jax.random.split(key, 5)

    n = 8  # number of rotated boxes
    # (xc, yc, w, h, theta), w/h strictly positive
    centers_p = jax.random.normal(k1, (n, 2), jnp.float32) * 4.0
    wh_p = jnp.abs(jax.random.normal(k2, (n, 2), jnp.float32)) + 1.0
    th_p = jax.random.uniform(k3, (n, 1), jnp.float32, -1.0, 1.0)
    pred = jnp.concatenate([centers_p, wh_p, th_p], axis=1)

    centers_t = centers_p + 0.5 * jax.random.normal(k4, (n, 2), jnp.float32)
    wh_t = wh_p + 0.3 * jnp.abs(jax.random.normal(k5, (n, 2), jnp.float32))
    th_t = th_p + 0.1
    target = jnp.concatenate([centers_t, wh_t, th_t], axis=1)

    # weight of shape (n, 5) like bbox-regression weights; some rows zeroed out
    weight = jnp.ones((n, 5), jnp.float32).at[0].set(0.0)

    loss_mod = GWDLoss(eps=1e-6, reduction='mean', loss_weight=1.0)
    loss = loss_mod(pred, target, weight=weight)
    loss = jax.block_until_ready(loss)

    assert bool(jnp.isfinite(loss)), "loss is not finite"
    print("KERNEL_OK")
</pallas_src>

<mosaic_0001>
module attributes {stable_mosaic.version = 11 : i64} {
  func.func @_gwd_kernel(%arg0: i32, %arg1: memref<10x8x128xf32, #tpu.memory_space<vmem>>, %arg2: memref<8x128xf32, #tpu.memory_space<vmem>>) attributes {dimension_semantics = [#tpu.dimension_semantics<parallel>], iteration_bounds = array<i64: 1>, scalar_prefetch = 0 : i64, scratch_operands = 0 : i64, tpu.core_type = #tpu.core_type<tc>, window_params = [{transform_indices = @transform_0, window_bounds = array<i64: 10, 8, 128>}, {transform_indices = @transform_1, window_bounds = array<i64: 8, 128>}]} {
    %c0 = arith.constant 0 : index
    %c0_0 = arith.constant 0 : index
    %c0_1 = arith.constant 0 : index
    %0 = vector.load %arg1[%c0, %c0_0, %c0_1] : memref<10x8x128xf32, #tpu.memory_space<vmem>>, vector<10x8x128xf32>
    %1 = vector.extract_strided_slice %0 {offsets = [0, 0, 0], sizes = [1, 8, 128], strides = [1, 1, 1]} : vector<10x8x128xf32> to vector<1x8x128xf32>
    %2 = vector.shape_cast %1 : vector<1x8x128xf32> to vector<8x128xf32>
    %3 = vector.extract_strided_slice %0 {offsets = [1, 0, 0], sizes = [1, 8, 128], strides = [1, 1, 1]} : vector<10x8x128xf32> to vector<1x8x128xf32>
    %4 = vector.shape_cast %3 : vector<1x8x128xf32> to vector<8x128xf32>
    %5 = vector.extract_strided_slice %0 {offsets = [2, 0, 0], sizes = [1, 8, 128], strides = [1, 1, 1]} : vector<10x8x128xf32> to vector<1x8x128xf32>
    %6 = vector.shape_cast %5 : vector<1x8x128xf32> to vector<8x128xf32>
    %7 = vector.extract_strided_slice %0 {offsets = [3, 0, 0], sizes = [1, 8, 128], strides = [1, 1, 1]} : vector<10x8x128xf32> to vector<1x8x128xf32>
    %8 = vector.shape_cast %7 : vector<1x8x128xf32> to vector<8x128xf32>
    %9 = vector.extract_strided_slice %0 {offsets = [4, 0, 0], sizes = [1, 8, 128], strides = [1, 1, 1]} : vector<10x8x128xf32> to vector<1x8x128xf32>
    %10 = vector.shape_cast %9 : vector<1x8x128xf32> to vector<8x128xf32>
    %11 = vector.extract_strided_slice %0 {offsets = [5, 0, 0], sizes = [1, 8, 128], strides = [1, 1, 1]} : vector<10x8x128xf32> to vector<1x8x128xf32>
    %12 = vector.shape_cast %11 : vector<1x8x128xf32> to vector<8x128xf32>
    %13 = vector.extract_strided_slice %0 {offsets = [6, 0, 0], sizes = [1, 8, 128], strides = [1, 1, 1]} : vector<10x8x128xf32> to vector<1x8x128xf32>
    %14 = vector.shape_cast %13 : vector<1x8x128xf32> to vector<8x128xf32>
    %15 = vector.extract_strided_slice %0 {offsets = [7, 0, 0], sizes = [1, 8, 128], strides = [1, 1, 1]} : vector<10x8x128xf32> to vector<1x8x128xf32>
    %16 = vector.shape_cast %15 : vector<1x8x128xf32> to vector<8x128xf32>
    %17 = vector.extract_strided_slice %0 {offsets = [8, 0, 0], sizes = [1, 8, 128], strides = [1, 1, 1]} : vector<10x8x128xf32> to vector<1x8x128xf32>
    %18 = vector.shape_cast %17 : vector<1x8x128xf32> to vector<8x128xf32>
    %19 = vector.extract_strided_slice %0 {offsets = [9, 0, 0], sizes = [1, 8, 128], strides = [1, 1, 1]} : vector<10x8x128xf32> to vector<1x8x128xf32>
    %20 = vector.shape_cast %19 : vector<1x8x128xf32> to vector<8x128xf32>
    %cst = arith.constant 2.000000e+00 : f32
    %21 = vector.broadcast %cst : f32 to vector<8x128xf32>
    %22 = arith.mulf %21, %10 : vector<8x128xf32>
    %23 = math.cos %22 : vector<8x128xf32>
    %cst_2 = arith.constant 2.000000e+00 : f32
    %24 = vector.broadcast %cst_2 : f32 to vector<8x128xf32>
    %25 = arith.mulf %24, %10 : vector<8x128xf32>
    %26 = math.sin %25 : vector<8x128xf32>
    %cst_3 = arith.constant 2.000000e+00 : f32
    %27 = vector.broadcast %cst_3 : f32 to vector<8x128xf32>
    %28 = arith.mulf %27, %20 : vector<8x128xf32>
    %29 = math.cos %28 : vector<8x128xf32>
    %cst_4 = arith.constant 2.000000e+00 : f32
    %30 = vector.broadcast %cst_4 : f32 to vector<8x128xf32>
    %31 = arith.mulf %30, %20 : vector<8x128xf32>
    %32 = math.sin %31 : vector<8x128xf32>
    %33 = arith.addf %6, %8 : vector<8x128xf32>
    %cst_5 = arith.constant 2.500000e-01 : f32
    %34 = vector.broadcast %cst_5 : f32 to vector<8x128xf32>
    %35 = arith.mulf %33, %34 : vector<8x128xf32>
    %36 = arith.subf %6, %8 : vector<8x128xf32>
    %cst_6 = arith.constant 2.500000e-01 : f32
    %37 = vector.broadcast %cst_6 : f32 to vector<8x128xf32>
    %38 = arith.mulf %36, %37 : vector<8x128xf32>
    %39 = arith.addf %16, %18 : vector<8x128xf32>
    %cst_7 = arith.constant 2.500000e-01 : f32
    %40 = vector.broadcast %cst_7 : f32 to vector<8x128xf32>
    %41 = arith.mulf %39, %40 : vector<8x128xf32>
    %42 = arith.subf %16, %18 : vector<8x128xf32>
    %cst_8 = arith.constant 2.500000e-01 : f32
    %43 = vector.broadcast %cst_8 : f32 to vector<8x128xf32>
    %44 = arith.mulf %42, %43 : vector<8x128xf32>
    %45 = arith.mulf %38, %23 : vector<8x128xf32>
    %46 = arith.addf %35, %45 : vector<8x128xf32>
    %47 = arith.mulf %38, %26 : vector<8x128xf32>
    %48 = arith.mulf %38, %23 : vector<8x128xf32>
    %49 = arith.subf %35, %48 : vector<8x128xf32>
    %50 = arith.mulf %44, %29 : vector<8x128xf32>
    %51 = arith.addf %41, %50 : vector<8x128xf32>
    %52 = arith.mulf %44, %32 : vector<8x128xf32>
    %53 = arith.mulf %44, %29 : vector<8x128xf32>
    %54 = arith.subf %41, %53 : vector<8x128xf32>
    %55 = arith.subf %2, %12 : vector<8x128xf32>
    %56 = arith.subf %4, %14 : vector<8x128xf32>
    %57 = arith.mulf %55, %55 : vector<8x128xf32>
    %58 = arith.mulf %56, %56 : vector<8x128xf32>
    %59 = arith.addf %57, %58 : vector<8x128xf32>
    %60 = arith.mulf %46, %46 : vector<8x128xf32>
    %cst_9 = arith.constant 2.000000e+00 : f32
    %61 = vector.broadcast %cst_9 : f32 to vector<8x128xf32>
    %62 = arith.mulf %61, %47 : vector<8x128xf32>
    %63 = arith.mulf %62, %47 : vector<8x128xf32>
    %64 = arith.addf %60, %63 : vector<8x128xf32>
    %65 = arith.mulf %49, %49 : vector<8x128xf32>
    %66 = arith.addf %64, %65 : vector<8x128xf32>
    %67 = arith.mulf %51, %51 : vector<8x128xf32>
    %cst_10 = arith.constant 2.000000e+00 : f32
    %68 = vector.broadcast %cst_10 : f32 to vector<8x128xf32>
    %69 = arith.mulf %68, %52 : vector<8x128xf32>
    %70 = arith.mulf %69, %52 : vector<8x128xf32>
    %71 = arith.addf %67, %70 : vector<8x128xf32>
    %72 = arith.mulf %54, %54 : vector<8x128xf32>
    %73 = arith.addf %71, %72 : vector<8x128xf32>
    %74 = arith.mulf %51, %46 : vector<8x128xf32>
    %75 = arith.mulf %52, %47 : vector<8x128xf32>
    %76 = arith.addf %74, %75 : vector<8x128xf32>
    %77 = arith.mulf %51, %47 : vector<8x128xf32>
    %78 = arith.mulf %52, %49 : vector<8x128xf32>
    %79 = arith.addf %77, %78 : vector<8x128xf32>
    %80 = arith.mulf %52, %46 : vector<8x128xf32>
    %81 = arith.mulf %54, %47 : vector<8x128xf32>
    %82 = arith.addf %80, %81 : vector<8x128xf32>
    %83 = arith.mulf %52, %47 : vector<8x128xf32>
    %84 = arith.mulf %54, %49 : vector<8x128xf32>
    %85 = arith.addf %83, %84 : vector<8x128xf32>
    %86 = arith.mulf %76, %76 : vector<8x128xf32>
    %87 = arith.mulf %79, %79 : vector<8x128xf32>
    %88 = arith.addf %86, %87 : vector<8x128xf32>
    %89 = arith.mulf %82, %82 : vector<8x128xf32>
    %90 = arith.addf %88, %89 : vector<8x128xf32>
    %91 = arith.mulf %85, %85 : vector<8x128xf32>
    %92 = arith.addf %90, %91 : vector<8x128xf32>
    %93 = arith.mulf %46, %49 : vector<8x128xf32>
    %94 = arith.mulf %47, %47 : vector<8x128xf32>
    %95 = arith.subf %93, %94 : vector<8x128xf32>
    %96 = arith.mulf %51, %54 : vector<8x128xf32>
    %97 = arith.mulf %52, %52 : vector<8x128xf32>
    %98 = arith.subf %96, %97 : vector<8x128xf32>
    %cst_11 = arith.constant 2.000000e+00 : f32
    %99 = vector.broadcast %cst_11 : f32 to vector<8x128xf32>
    %100 = arith.mulf %99, %95 : vector<8x128xf32>
    %101 = arith.mulf %100, %98 : vector<8x128xf32>
    %102 = arith.addf %92, %101 : vector<8x128xf32>
    %cst_12 = arith.constant 0.000000e+00 : f32
    %103 = vector.broadcast %cst_12 : f32 to vector<8x128xf32>
    %104 = arith.maximumf %102, %103 : vector<8x128xf32>
    %105 = math.sqrt %104 : vector<8x128xf32>
    %106 = arith.addf %66, %73 : vector<8x128xf32>
    %cst_13 = arith.constant 2.000000e+00 : f32
    %107 = vector.broadcast %cst_13 : f32 to vector<8x128xf32>
    %108 = arith.mulf %107, %105 : vector<8x128xf32>
    %109 = arith.subf %106, %108 : vector<8x128xf32>
    %110 = arith.addf %59, %109 : vector<8x128xf32>
    %cst_14 = arith.constant 0.000000e+00 : f32
    %111 = vector.broadcast %cst_14 : f32 to vector<8x128xf32>
    %112 = arith.maximumf %110, %111 : vector<8x128xf32>
    %cst_15 = arith.constant 9.99999997E-7 : f32
    %113 = vector.broadcast %cst_15 : f32 to vector<8x128xf32>
    %114 = arith.addf %112, %113 : vector<8x128xf32>
    %115 = math.sqrt %114 : vector<8x128xf32>
    %cst_16 = arith.constant 2.000000e+00 : f32
    %116 = vector.broadcast %cst_16 : f32 to vector<8x128xf32>
    %117 = arith.addf %115, %116 : vector<8x128xf32>
    %118 = tpu.reciprocal %117 {approx = true} : vector<8x128xf32> -> vector<8x128xf32>
    %119 = arith.mulf %117, %118 : vector<8x128xf32>
    %cst_17 = arith.constant 2.000000e+00 : f32
    %120 = vector.broadcast %cst_17 : f32 to vector<8x128xf32>
    %121 = arith.subf %120, %119 : vector<8x128xf32>
    %122 = arith.mulf %118, %121 : vector<8x128xf32>
    %cst_18 = arith.constant 1.000000e+00 : f32
    %123 = vector.broadcast %cst_18 : f32 to vector<8x128xf32>
    %124 = arith.subf %123, %122 : vector<8x128xf32>
    %c0_19 = arith.constant 0 : index
    %c0_20 = arith.constant 0 : index
    %125 = vector.load %arg2[%c0_19, %c0_20] : memref<8x128xf32, #tpu.memory_space<vmem>>, vector<8x128xf32>
    tpu.vector_store %arg2[%c0_19, %c0_20], %124 {strides = array<i32>} : memref<8x128xf32, #tpu.memory_space<vmem>>, vector<8x128xf32>,
    return
  }
  func.func @transform_0(%arg0: i32) -> (i32, i32, i32) {
    %c0_i32 = arith.constant 0 : i32
    %c0_i32_0 = arith.constant 0 : i32
    %c0_i32_1 = arith.constant 0 : i32
    return %c0_i32, %arg0, %c0_i32_0 : i32, i32, i32
  }
  func.func @transform_1(%arg0: i32) -> (i32, i32) {
    %c0_i32 = arith.constant 0 : i32
    %c0_i32_0 = arith.constant 0 : i32
    return %arg0, %c0_i32 : i32, i32
  }
}

</mosaic_0001>

<llo_original>
// kernel: tpu_custom_call.1
$region0: #{tpu_custom_call.1}
  #allocation0 [shape = 'u32[]', space=smem, size = 0x4, offset = 0x4, fixed_abs, tag = 'smem constant byte address 0x4 - core index']
  #allocation1 [shape = 'u32[144,128]{1,0:T(1,128)}', space=vmem, size = 0x12000, scoped, tag = 'internal scratch']
  %s0 = inlined_call_operand.hbm [shape: f32[10,8,128], index: 0, kind: input, shape index: {}]
  %s1 = inlined_call_operand.hbm [shape: f32[8,128], index: 1, kind: output, shape index: {}]
  %s2 = sld [smem:[#allocation0]]
  $region18: #{tpu_custom_call.1} parent=0
    _
  %s4 = ssub.s32 1, %s2
  %s5 = scalar_select 0, %s4, %s2
  $region1: #{tpu_custom_call.1} parent=0
    #allocation2 [shape = 'u8[40960]{0}', space=vmem, size = 0xa000, scoped, tag = 'input window, operand 0, single buffered']
    #allocation3 [shape = 's32[1]{0}', space=sflag, size = 0x4, scoped, tag = 'scoped memory for tpu_custom_call.1']
    #allocation4 [shape = 's32[1]{0}', space=sflag, size = 0x4, scoped, tag = 'scoped memory for tpu_custom_call.1']
    #allocation5 [shape = 'u8[4096]{0}', space=vmem, size = 0x1000, scoped, tag = 'output window, operand 0, single buffered']
    %6 = vsyncpa [#allocation3], 0
    %7 = vsyncpa [#allocation4], 0
    // Predicated region
    $region2: #{tpu_custom_call.1} parent=1 // pred_check
      _
    $region3: #{tpu_custom_call.1} parent=1 // pred_check_branch
      %9 = sbr.rel (0) target = $region5
    $region4: #{tpu_custom_call.1} parent=1 // pred_region
      %s11 = ssub.s32 1280, 1280
      %12 = vsyncadd [#allocation3], %s11
      %s13 = sshll.u32 [#allocation2], 4
      %s14 = int_to_ptr.vmem [resolvable:$true] %s13
      %19 = dma.hbm_to_vmem [thread:$0]  %s0, 1280, %s14, [#allocation3], 128, 128, 8
    $region5: #{tpu_custom_call.1} parent=1 // pred_fallthru
      _
    // Predicated region
    $region6: #{tpu_custom_call.1} parent=1 // pred_check
      _
    $region7: #{tpu_custom_call.1} parent=1 // pred_check_branch
      %21 = sbr.rel (0) target = $region9
    $region8: #{tpu_custom_call.1} parent=1 // pred_region
      %22 = dma.done [#allocation3], 1280
    $region9: #{tpu_custom_call.1} parent=1 // pred_fallthru
      _
    %v23 = vld [vmem:[#allocation2] sm:$0xff]
    %v24 = vld [vmem:[#allocation2 + $0x8] sm:$0xff]
    %v25 = vld [vmem:[#allocation2 + $0x10] sm:$0xff]
    %v26 = vld [vmem:[#allocation2 + $0x18] sm:$0xff]
    %v27 = vld [vmem:[#allocation2 + $0x20] sm:$0xff]
    %v28 = vld [vmem:[#allocation2 + $0x28] sm:$0xff]
    %v29 = vld [vmem:[#allocation2 + $0x30] sm:$0xff]
    %v30 = vld [vmem:[#allocation2 + $0x38] sm:$0xff]
    %v31 = vld [vmem:[#allocation2 + $0x40] sm:$0xff]
    %v32 = vld [vmem:[#allocation2 + $0x48] sm:$0xff]
    %v33 = vmul.f32 %v27, 2.0
    %v34 = vand.u32 2147483647, %v33
    %vm35 = vcmp.le.f32.partialorder %v34, 0.7853982
    %vm36 = vcmp.lt.s32.totalorder %v33, 0
    %v37 = vand.u32 %v33, 2139095040
    %v38 = vshrl.u32 %v37, 23
    %v39 = vsub.s32 %v38, 127
    %v40 = vand.u32 2147483647, %v33
    %v41 = vand.u32 %v40, 8388607
    %v42 = vor.u32 %v41, 8388608
    %v43 = vsub.s32 0, %v42
    %v44 = vadd.s32 %v39, 1
    %vm45 = vcmp.gt.s32.totalorder %v44, 0
    %v46 = vsel %vm45, %v44, 0
    %v47 = vshrl.u32 %v46, 5
    %v48 = vand.u32 %v46, 31
    %v49 = vsub.s32 32, %v48
    %v50 = vshrl.u32 683565275, %v49
    %v51 = vshll.u32 683565275, %v48
    %v52 = vshrl.u32 2475754826, %v49
    %v53 = vor.u32 %v51, %v52
    %v54 = vshll.u32 2475754826, %v48
    %v55 = vshrl.u32 2131351028, %v49
    %v56 = vor.u32 %v54, %v55
    %v57 = vshll.u32 2131351028, %v48
    %v58 = vshrl.u32 2102212464, %v49
    %v59 = vor.u32 %v57, %v58
    %v60 = vshll.u32 2102212464, %v48
    %v61 = vshrl.u32 920167782, %v49
    %v62 = vor.u32 %v60, %v61
    %v63 = vshll.u32 920167782, %v48
    %v64 = vshrl.u32 1326507024, %v49
    %v65 = vor.u32 %v63, %v64
    %vm66 = vcmp.lt.s32.totalorder %v47, 1
    %vm67 = vcmp.lt.s32.totalorder %v47, 2
    %vm68 = vcmp.lt.s32.totalorder %v47, 3
    %vm69 = vcmp.lt.s32.totalorder %v47, 4
    %v70 = vsel %vm66, %v50, %v53
    %v71 = vsel %vm69, %v59, 2102212464
    %v72 = vsel %vm68, %v56, %v71
    %v73 = vsel %vm67, %v70, %v72
    %v74 = vsel %vm66, %v53, %v56
    %v75 = vsel %vm69, %v62, 920167782
    %v76 = vsel %vm68, %v59, %v75
    %v77 = vsel %vm67, %v74, %v76
    %v78 = vsel %vm66, %v56, %v59
    %v79 = vsel %vm69, %v65, 1326507024
    %v80 = vsel %vm68, %v62, %v79
    %v81 = vsel %vm67, %v78, %v80
    %v82 = vshll.u32 %v42, 8
    %v83 = vmul.u32.u64.compose %v82, %v81
    %v84 = vextract.low.u32 %v83
    %v85 = vextract.high.u32 %v83
    %v86 = vmul.u32.u64.compose %v82, %v77
    %v87 = vextract.low.u32 %v86
    %v88 = vextract.high.u32 %v86
    %v89 = vmul.u32 %v82, %v73
    %v90 = vadd.s32 %v85, %v87
    %vm91 = vc.u32 %v85, %v87
    %v92 = vadd.s32 %v88, 1
    %v93 = vsel %vm91, %v92, %v88
    %v94 = vadd.s32 %v89, %v93
    %v95 = vadd.s32 %v94, 536870912
    %v96 = vshrl.u32 %v95, 30
    %v97 = vshll.u32 %v96, 30
    %v98 = vsub.s32 %v94, %v97
    %vm99 = vcmp.lt.s32.totalorder %v98, 0
    %v100 = vsub.s32 0, %v98
    %v101 = vsel %vm99, %v100, %v98
    %v102 = vclz %v101
    %v103 = vsub.s32 %v102, 2
    %vm104 = vcmp.gt.s32.totalorder 0, %v103
    %v105 = vsel %vm104, 0, %v103
    %v106 = vsub.s32 32, %v105
    %v107 = vshll.u32 %v98, %v105
    %v108 = vshrl.u32 %v90, %v106
    %v109 = vor.u32 %v107, %v108
    %v110 = vsub.s32 4294967266, %v105
    %v111 = vadd.s32 %v110, 127
    %v112 = vshll.u32 %v111, 23
    %v113 = vor.u32 4788187, %v112
    %v114 = vand.u32 2147483647, %v113
    %v116 = vcvt.s32.f32 %v109
    %v117 = vmul.f32 %v116, %v114
    %v118 = vxor.u32 %v117, 2147483648
    %v119 = vsel %vm36, %v118, %v117
    %v120 = vsub.s32 4, %v96
    %v121 = vsel %vm36, %v120, %v96
    %v122 = vsel %vm35, %v33, %v119
    %v123 = vsel %vm35, 0, %v121
    %v124 = vcosq.f32.pop %v122
    %v125 = vsinq.f32.pop %v122
    %vm126 = vweird.f32 %v33
    %v127 = vand.u32 %v123, 3
    %vm128 = vcmp.lt.s32.totalorder %v127, 2
    %vm129 = vcmp.eq.s32.totalorder %v127, 0
    %v130 = vxor.u32 %v125, 2147483648
    %v131 = vsel %vm129, %v124, %v130
    %vm132 = vcmp.eq.s32.totalorder %v127, 2
    %v133 = vxor.u32 %v124, 2147483648
    %v134 = vsel %vm132, %v133, %v125
    %v135 = vsel %vm128, %v131, %v134
    %v136 = vsel %vm126, nan, %v135
    %v137 = vand.u32 2147483647, %v33
    %vm138 = vcmp.le.f32.partialorder %v137, 0.7853982
    %vm139 = vcmp.lt.s32.totalorder %v33, 0
    %v140 = vand.u32 %v33, 2139095040
    %v141 = vshrl.u32 %v140, 23
    %v142 = vsub.s32 %v141, 127
    %v143 = vand.u32 2147483647, %v33
    %v144 = vand.u32 %v143, 8388607
    %v145 = vor.u32 %v144, 8388608
    %v146 = vsub.s32 0, %v145
    %v147 = vadd.s32 %v142, 1
    %vm148 = vcmp.gt.s32.totalorder %v147, 0
    %v149 = vsel %vm148, %v147, 0
    %v150 = vshrl.u32 %v149, 5
    %v151 = vand.u32 %v149, 31
    %v152 = vsub.s32 32, %v151
    %v153 = vshrl.u32 683565275, %v152
    %v154 = vshll.u32 683565275, %v151
    %v155 = vshrl.u32 2475754826, %v152
    %v156 = vor.u32 %v154, %v155
    %v157 = vshll.u32 2475754826, %v151
    %v158 = vshrl.u32 2131351028, %v152
    %v159 = vor.u32 %v157, %v158
    %v160 = vshll.u32 2131351028, %v151
    %v161 = vshrl.u32 2102212464, %v152
    %v162 = vor.u32 %v160, %v161
    %v163 = vshll.u32 2102212464, %v151
    %v164 = vshrl.u32 920167782, %v152
    %v165 = vor.u32 %v163, %v164
    %v166 = vshll.u32 920167782, %v151
    %v167 = vshrl.u32 1326507024, %v152
    %v168 = vor.u32 %v166, %v167
    %vm169 = vcmp.lt.s32.totalorder %v150, 1
    %vm170 = vcmp.lt.s32.totalorder %v150, 2
    %vm171 = vcmp.lt.s32.totalorder %v150, 3
    %vm172 = vcmp.lt.s32.totalorder %v150, 4
    %v173 = vsel %vm169, %v153, %v156
    %v174 = vsel %vm172, %v162, 2102212464
    %v175 = vsel %vm171, %v159, %v174
    %v176 = vsel %vm170, %v173, %v175
    %v177 = vsel %vm169, %v156, %v159
    %v178 = vsel %vm172, %v165, 920167782
    %v179 = vsel %vm171, %v162, %v178
    %v180 = vsel %vm170, %v177, %v179
    %v181 = vsel %vm169, %v159, %v162
    %v182 = vsel %vm172, %v168, 1326507024
    %v183 = vsel %vm171, %v165, %v182
    %v184 = vsel %vm170, %v181, %v183
    %v185 = vshll.u32 %v145, 8
    %v186 = vmul.u32.u64.compose %v185, %v184
    %v187 = vextract.low.u32 %v186
    %v188 = vextract.high.u32 %v186
    %v189 = vmul.u32.u64.compose %v185, %v180
    %v190 = vextract.low.u32 %v189
    %v191 = vextract.high.u32 %v189
    %v192 = vmul.u32 %v185, %v176
    %v193 = vadd.s32 %v188, %v190
    %vm194 = vc.u32 %v188, %v190
    %v195 = vadd.s32 %v191, 1
    %v196 = vsel %vm194, %v195, %v191
    %v197 = vadd.s32 %v192, %v196
    %v198 = vadd.s32 %v197, 536870912
    %v199 = vshrl.u32 %v198, 30
    %v200 = vshll.u32 %v199, 30
    %v201 = vsub.s32 %v197, %v200
    %vm202 = vcmp.lt.s32.totalorder %v201, 0
    %v203 = vsub.s32 0, %v201
    %v204 = vsel %vm202, %v203, %v201
    %v205 = vclz %v204
    %v206 = vsub.s32 %v205, 2
    %vm207 = vcmp.gt.s32.totalorder 0, %v206
    %v208 = vsel %vm207, 0, %v206
    %v209 = vsub.s32 32, %v208
    %v210 = vshll.u32 %v201, %v208
    %v211 = vshrl.u32 %v193, %v209
    %v212 = vor.u32 %v210, %v211
    %v213 = vsub.s32 4294967266, %v208
    %v214 = vadd.s32 %v213, 127
    %v215 = vshll.u32 %v214, 23
    %v216 = vor.u32 4788187, %v215
    %v217 = vand.u32 2147483647, %v216
    %v219 = vcvt.s32.f32 %v212
    %v220 = vmul.f32 %v219, %v217
    %v221 = vxor.u32 %v220, 2147483648
    %v222 = vsel %vm139, %v221, %v220
    %v223 = vsub.s32 4, %v199
    %v224 = vsel %vm139, %v223, %v199
    %v225 = vsel %vm138, %v33, %v222
    %v226 = vsel %vm138, 0, %v224
    %v227 = vcosq.f32.pop %v225
    %v228 = vsinq.f32.pop %v225
    %vm229 = vweird.f32 %v33
    %v230 = vadd.s32 %v226, 3
    %v231 = vand.u32 %v230, 3
    %vm232 = vcmp.lt.s32.totalorder %v231, 2
    %vm233 = vcmp.eq.s32.totalorder %v231, 0
    %v234 = vxor.u32 %v228, 2147483648
    %v235 = vsel %vm233, %v227, %v234
    %vm236 = vcmp.eq.s32.totalorder %v231, 2
    %v237 = vxor.u32 %v227, 2147483648
    %v238 = vsel %vm236, %v237, %v228
    %v239 = vsel %vm232, %v235, %v238
    %v240 = vsel %vm229, nan, %v239
    %v241 = vmul.f32 %v32, 2.0
    %v242 = vand.u32 2147483647, %v241
    %vm243 = vcmp.le.f32.partialorder %v242, 0.7853982
    %vm244 = vcmp.lt.s32.totalorder %v241, 0
    %v245 = vand.u32 %v241, 2139095040
    %v246 = vshrl.u32 %v245, 23
    %v247 = vsub.s32 %v246, 127
    %v248 = vand.u32 2147483647, %v241
    %v249 = vand.u32 %v248, 8388607
    %v250 = vor.u32 %v249, 8388608
    %v251 = vsub.s32 0, %v250
    %v252 = vadd.s32 %v247, 1
    %vm253 = vcmp.gt.s32.totalorder %v252, 0
    %v254 = vsel %vm253, %v252, 0
    %v255 = vshrl.u32 %v254, 5
    %v256 = vand.u32 %v254, 31
    %v257 = vsub.s32 32, %v256
    %v258 = vshrl.u32 683565275, %v257
    %v259 = vshll.u32 683565275, %v256
    %v260 = vshrl.u32 2475754826, %v257
    %v261 = vor.u32 %v259, %v260
    %v262 = vshll.u32 2475754826, %v256
    %v263 = vshrl.u32 2131351028, %v257
    %v264 = vor.u32 %v262, %v263
    %v265 = vshll.u32 2131351028, %v256
    %v266 = vshrl.u32 2102212464, %v257
    %v267 = vor.u32 %v265, %v266
    %v268 = vshll.u32 2102212464, %v256
    %v269 = vshrl.u32 920167782, %v257
    %v270 = vor.u32 %v268, %v269
    %v271 = vshll.u32 920167782, %v256
    %v272 = vshrl.u32 1326507024, %v257
    %v273 = vor.u32 %v271, %v272
    %vm274 = vcmp.lt.s32.totalorder %v255, 1
    %vm275 = vcmp.lt.s32.totalorder %v255, 2
    %vm276 = vcmp.lt.s32.totalorder %v255, 3
    %vm277 = vcmp.lt.s32.totalorder %v255, 4
    %v278 = vsel %vm274, %v258, %v261
    %v279 = vsel %vm277, %v267, 2102212464
    %v280 = vsel %vm276, %v264, %v279
    %v281 = vsel %vm275, %v278, %v280
    %v282 = vsel %vm274, %v261, %v264
    %v283 = vsel %vm277, %v270, 920167782
    %v284 = vsel %vm276, %v267, %v283
    %v285 = vsel %vm275, %v282, %v284
    %v286 = vsel %vm274, %v264, %v267
    %v287 = vsel %vm277, %v273, 1326507024
    %v288 = vsel %vm276, %v270, %v287
    %v289 = vsel %vm275, %v286, %v288
    %v290 = vshll.u32 %v250, 8
    %v291 = vmul.u32.u64.compose %v290, %v289
    %v292 = vextract.low.u32 %v291
    %v293 = vextract.high.u32 %v291
    %v294 = vmul.u32.u64.compose %v290, %v285
    %v295 = vextract.low.u32 %v294
    %v296 = vextract.high.u32 %v294
    %v297 = vmul.u32 %v290, %v281
    %v298 = vadd.s32 %v293, %v295
    %vm299 = vc.u32 %v293, %v295
    %v300 = vadd.s32 %v296, 1
    %v301 = vsel %vm299, %v300, %v296
    %v302 = vadd.s32 %v297, %v301
    %v303 = vadd.s32 %v302, 536870912
    %v304 = vshrl.u32 %v303, 30
    %v305 = vshll.u32 %v304, 30
    %v306 = vsub.s32 %v302, %v305
    %vm307 = vcmp.lt.s32.totalorder %v306, 0
    %v308 = vsub.s32 0, %v306
    %v309 = vsel %vm307, %v308, %v306
    %v310 = vclz %v309
    %v311 = vsub.s32 %v310, 2
    %vm312 = vcmp.gt.s32.totalorder 0, %v311
    %v313 = vsel %vm312, 0, %v311
    %v314 = vsub.s32 32, %v313
    %v315 = vshll.u32 %v306, %v313
    %v316 = vshrl.u32 %v298, %v314
    %v317 = vor.u32 %v315, %v316
    %v318 = vsub.s32 4294967266, %v313
    %v319 = vadd.s32 %v318, 127
    %v320 = vshll.u32 %v319, 23
    %v321 = vor.u32 4788187, %v320
    %v322 = vand.u32 2147483647, %v321
    %v324 = vcvt.s32.f32 %v317
    %v325 = vmul.f32 %v324, %v322
    %v326 = vxor.u32 %v325, 2147483648
    %v327 = vsel %vm244, %v326, %v325
    %v328 = vsub.s32 4, %v304
    %v329 = vsel %vm244, %v328, %v304
    %v330 = vsel %vm243, %v241, %v327
    %v331 = vsel %vm243, 0, %v329
    %v332 = vcosq.f32.pop %v330
    %v333 = vsinq.f32.pop %v330
    %vm334 = vweird.f32 %v241
    %v335 = vand.u32 %v331, 3
    %vm336 = vcmp.lt.s32.totalorder %v335, 2
    %vm337 = vcmp.eq.s32.totalorder %v335, 0
    %v338 = vxor.u32 %v333, 2147483648
    %v339 = vsel %vm337, %v332, %v338
    %vm340 = vcmp.eq.s32.totalorder %v335, 2
    %v341 = vxor.u32 %v332, 2147483648
    %v342 = vsel %vm340, %v341, %v333
    %v343 = vsel %vm336, %v339, %v342
    %v344 = vsel %vm334, nan, %v343
    %v345 = vand.u32 2147483647, %v241
    %vm346 = vcmp.le.f32.partialorder %v345, 0.7853982
    %vm347 = vcmp.lt.s32.totalorder %v241, 0
    %v348 = vand.u32 %v241, 2139095040
    %v349 = vshrl.u32 %v348, 23
    %v350 = vsub.s32 %v349, 127
    %v351 = vand.u32 2147483647, %v241
    %v352 = vand.u32 %v351, 8388607
    %v353 = vor.u32 %v352, 8388608
    %v354 = vsub.s32 0, %v353
    %v355 = vadd.s32 %v350, 1
    %vm356 = vcmp.gt.s32.totalorder %v355, 0
    %v357 = vsel %vm356, %v355, 0
    %v358 = vshrl.u32 %v357, 5
    %v359 = vand.u32 %v357, 31
    %v360 = vsub.s32 32, %v359
    %v361 = vshrl.u32 683565275, %v360
    %v362 = vshll.u32 683565275, %v359
    %v363 = vshrl.u32 2475754826, %v360
    %v364 = vor.u32 %v362, %v363
    %v365 = vshll.u32 2475754826, %v359
    %v366 = vshrl.u32 2131351028, %v360
    %v367 = vor.u32 %v365, %v366
    %v368 = vshll.u32 2131351028, %v359
    %v369 = vshrl.u32 2102212464, %v360
    %v370 = vor.u32 %v368, %v369
    %v371 = vshll.u32 2102212464, %v359
    %v372 = vshrl.u32 920167782, %v360
    %v373 = vor.u32 %v371, %v372
    %v374 = vshll.u32 920167782, %v359
    %v375 = vshrl.u32 1326507024, %v360
    %v376 = vor.u32 %v374, %v375
    %vm377 = vcmp.lt.s32.totalorder %v358, 1
    %vm378 = vcmp.lt.s32.totalorder %v358, 2
    %vm379 = vcmp.lt.s32.totalorder %v358, 3
    %vm380 = vcmp.lt.s32.totalorder %v358, 4
    %v381 = vsel %vm377, %v361, %v364
    %v382 = vsel %vm380, %v370, 2102212464
    %v383 = vsel %vm379, %v367, %v382
    %v384 = vsel %vm378, %v381, %v383
    %v385 = vsel %vm377, %v364, %v367
    %v386 = vsel %vm380, %v373, 920167782
    %v387 = vsel %vm379, %v370, %v386
    %v388 = vsel %vm378, %v385, %v387
    %v389 = vsel %vm377, %v367, %v370
    %v390 = vsel %vm380, %v376, 1326507024
    %v391 = vsel %vm379, %v373, %v390
    %v392 = vsel %vm378, %v389, %v391
    %v393 = vshll.u32 %v353, 8
    %v394 = vmul.u32.u64.compose %v393, %v392
    %v395 = vextract.low.u32 %v394
    %v396 = vextract.high.u32 %v394
    %v397 = vmul.u32.u64.compose %v393, %v388
    %v398 = vextract.low.u32 %v397
    %v399 = vextract.high.u32 %v397
    %v400 = vmul.u32 %v393, %v384
    %v401 = vadd.s32 %v396, %v398
    %vm402 = vc.u32 %v396, %v398
    %v403 = vadd.s32 %v399, 1
    %v404 = vsel %vm402, %v403, %v399
    %v405 = vadd.s32 %v400, %v404
    %v406 = vadd.s32 %v405, 536870912
    %v407 = vshrl.u32 %v406, 30
    %v408 = vshll.u32 %v407, 30
    %v409 = vsub.s32 %v405, %v408
    %vm410 = vcmp.lt.s32.totalorder %v409, 0
    %v411 = vsub.s32 0, %v409
    %v412 = vsel %vm410, %v411, %v409
    %v413 = vclz %v412
    %v414 = vsub.s32 %v413, 2
    %vm415 = vcmp.gt.s32.totalorder 0, %v414
    %v416 = vsel %vm415, 0, %v414
    %v417 = vsub.s32 32, %v416
    %v418 = vshll.u32 %v409, %v416
    %v419 = vshrl.u32 %v401, %v417
    %v420 = vor.u32 %v418, %v419
    %v421 = vsub.s32 4294967266, %v416
    %v422 = vadd.s32 %v421, 127
    %v423 = vshll.u32 %v422, 23
    %v424 = vor.u32 4788187, %v423
    %v425 = vand.u32 2147483647, %v424
    %v427 = vcvt.s32.f32 %v420
    %v428 = vmul.f32 %v427, %v425
    %v429 = vxor.u32 %v428, 2147483648
    %v430 = vsel %vm347, %v429, %v428
    %v431 = vsub.s32 4, %v407
    %v432 = vsel %vm347, %v431, %v407
    %v433 = vsel %vm346, %v241, %v430
    %v434 = vsel %vm346, 0, %v432
    %v435 = vcosq.f32.pop %v433
    %v436 = vsinq.f32.pop %v433
    %vm437 = vweird.f32 %v241
    %v438 = vadd.s32 %v434, 3
    %v439 = vand.u32 %v438, 3
    %vm440 = vcmp.lt.s32.totalorder %v439, 2
    %vm441 = vcmp.eq.s32.totalorder %v439, 0
    %v442 = vxor.u32 %v436, 2147483648
    %v443 = vsel %vm441, %v435, %v442
    %vm444 = vcmp.eq.s32.totalorder %v439, 2
    %v445 = vxor.u32 %v435, 2147483648
    %v446 = vsel %vm444, %v445, %v436
    %v447 = vsel %vm440, %v443, %v446
    %v448 = vsel %vm437, nan, %v447
    %v449 = vadd.f32 %v25, %v26
    %v450 = vmul.f32 %v449, 0.25
    %v451 = vsub.f32 %v25, %v26
    %v452 = vmul.f32 %v451, 0.25
    %v453 = vadd.f32 %v30, %v31
    %v454 = vmul.f32 %v453, 0.25
    %v455 = vsub.f32 %v30, %v31
    %v456 = vmul.f32 %v455, 0.25
    %v457 = vmul.f32 %v452, %v136
    %v458 = vadd.f32 %v450, %v457
    %v459 = vmul.f32 %v452, %v240
    %v460 = vsub.f32 %v450, %v457
    %v461 = vmul.f32 %v456, %v344
    %v462 = vadd.f32 %v454, %v461
    %v463 = vmul.f32 %v456, %v448
    %v464 = vsub.f32 %v454, %v461
    %v465 = vsub.f32 %v23, %v28
    %v466 = vsub.f32 %v24, %v29
    %v467 = vmul.f32 %v465, %v465
    %v468 = vmul.f32 %v466, %v466
    %v469 = vadd.f32 %v467, %v468
    %v470 = vmul.f32 %v458, %v458
    %v471 = vmul.f32 %v459, 2.0
    %v472 = vmul.f32 %v471, %v459
    %v473 = vadd.f32 %v470, %v472
    %v474 = vmul.f32 %v460, %v460
    %v475 = vadd.f32 %v473, %v474
    %v476 = vmul.f32 %v462, %v462
    %v477 = vmul.f32 %v463, 2.0
    %v478 = vmul.f32 %v477, %v463
    %v479 = vadd.f32 %v476, %v478
    %v480 = vmul.f32 %v464, %v464
    %v481 = vadd.f32 %v479, %v480
    %v482 = vmul.f32 %v462, %v458
    %v483 = vmul.f32 %v463, %v459
    %v484 = vadd.f32 %v482, %v483
    %v485 = vmul.f32 %v462, %v459
    %v486 = vmul.f32 %v463, %v460
    %v487 = vadd.f32 %v485, %v486
    %v488 = vmul.f32 %v463, %v458
    %v489 = vmul.f32 %v464, %v459
    %v490 = vadd.f32 %v488, %v489
    %v491 = vmul.f32 %v464, %v460
    %v492 = vadd.f32 %v483, %v491
    %v493 = vmul.f32 %v484, %v484
    %v494 = vmul.f32 %v487, %v487
    %v495 = vadd.f32 %v493, %v494
    %v496 = vmul.f32 %v490, %v490
    %v497 = vadd.f32 %v495, %v496
    %v498 = vmul.f32 %v492, %v492
    %v499 = vadd.f32 %v497, %v498
    %v500 = vmul.f32 %v458, %v460
    %v501 = vmul.f32 %v459, %v459
    %v502 = vsub.f32 %v500, %v501
    %v503 = vmul.f32 %v462, %v464
    %v504 = vmul.f32 %v463, %v463
    %v505 = vsub.f32 %v503, %v504
    %v506 = vmul.f32 %v502, 2.0
    %v507 = vmul.f32 %v506, %v505
    %v508 = vadd.f32 %v499, %v507
    %v509 = vmax.f32 %v508, 0.0
    %v510 = vrsqrt.pop %v509
    %v511 = vmul.f32 %v509, %v510
    %vm512 = vcmp.eq.f32.partialorder %v509, inf
    %v513 = vsel %vm512, %v509, %v511
    %vm514 = vcmp.eq.f32.partialorder %v509, 0.0
    %v515 = vand.u32 %v509, 2147483648
    %v516 = vsel %vm514, %v515, %v513
    %v517 = vadd.f32 %v475, %v481
    %v518 = vmul.f32 %v516, 2.0
    %v519 = vsub.f32 %v517, %v518
    %v520 = vadd.f32 %v469, %v519
    %v521 = vmax.f32 %v520, 0.0
    %v522 = vadd.f32 %v521, 1e-06
    %v523 = vrsqrt.pop %v522
    %v524 = vmul.f32 %v522, %v523
    %vm525 = vcmp.eq.f32.partialorder %v522, inf
    %v526 = vsel %vm525, %v522, %v524
    %vm527 = vcmp.eq.f32.partialorder %v522, 0.0
    %v528 = vand.u32 %v522, 2147483648
    %v529 = vsel %vm527, %v528, %v526
    %v530 = vadd.f32 %v529, 2.0
    %v531 = vrcp.pop %v530
    %v532 = vmul.f32 %v530, %v531
    %v533 = vsub.f32 2.0, %v532
    %v534 = vmul.f32 %v531, %v533
    %v535 = vsub.f32 1.0, %v534
    %536 = vst [vmem:[#allocation5] sm:$0xff] %v535
    // Predicated region
    $region10: #{tpu_custom_call.1} parent=1 // pred_check
      _
    $region11: #{tpu_custom_call.1} parent=1 // pred_check_branch
      %538 = sbr.rel (0) target = $region13
    $region12: #{tpu_custom_call.1} parent=1 // pred_region
      %s540 = ssub.s32 128, 128
      %541 = vsyncadd [#allocation4], %s540
      %s543 = sshll.u32 [#allocation5], 4
      %s544 = int_to_ptr.vmem [resolvable:$true] %s543
      %546 = dma.vmem_to_hbm [thread:$0]  %s544, 128, %s1, [#allocation4]
    $region13: #{tpu_custom_call.1} parent=1 // pred_fallthru
      _
    // Predicated region
    $region14: #{tpu_custom_call.1} parent=1 // pred_check
      _
    $region15: #{tpu_custom_call.1} parent=1 // pred_check_branch
      %548 = sbr.rel (0) target = $region17
    $region16: #{tpu_custom_call.1} parent=1 // pred_region
      %549 = dma.done [#allocation4], 128
    $region17: #{tpu_custom_call.1} parent=1 // pred_fallthru
      _
    %550 = vsyncpa [#allocation3], 1
    %551 = vsyncpa [#allocation4], 1

</llo_original>
